<compile_context>
chip_gen: v6e
topology: v6e:2x2x1
jax: 0.10.0
libtpu: 0.0.40
codegen_flags: <defaults>
</compile_context>

<pallas_src>
import functools

import jax
import jax.numpy as jnp
from jax.experimental import pallas as pl
from jax.experimental.pallas import tpu as pltpu


def _attention_gate_kernel(g_ref, x_ref, wg_ref, wx_ref, b_ref, wpsi_ref,
                           bpsi_ref, out_ref, *, channel_mix, mxu_precision):
    """Processes one (1, C, TP) tile: channels on sublanes, pixels on lanes."""
    g = g_ref[0]                               # (C, TP), native dtype
    x = x_ref[0]                               # (C, TP), native dtype

    if channel_mix == "mxu":
        # Two dots instead of a (2C, TP) concat: no full-tile VMEM copy, and
        # the MXU consumes the native (bf16/f32) tiles directly.
        acc = jnp.dot(wg_ref[...], g, preferred_element_type=jnp.float32,
                      precision=mxu_precision)
        acc = acc + jnp.dot(wx_ref[...], x, preferred_element_type=jnp.float32,
                            precision=mxu_precision)
    else:
        # Tiny-C path (C <= 4): 2C broadcast-MACs on the VPU.  Math in f32
        # (v5e has no bf16 VPU lanes); at C <= 4 the temporaries are a
        # handful of vregs.
        wg = wg_ref[...].astype(jnp.float32)
        wx = wx_ref[...].astype(jnp.float32)
        gf = g.astype(jnp.float32)
        xf = x.astype(jnp.float32)
        C = gf.shape[0]
        acc = wg[:, 0:1] * gf[0:1, :] + wx[:, 0:1] * xf[0:1, :]
        for ci in range(1, C):
            acc = acc + wg[:, ci:ci + 1] * gf[ci:ci + 1, :]
            acc = acc + wx[:, ci:ci + 1] * xf[ci:ci + 1, :]

    # ReLU(g1 + x1); combined (bg + bx) bias broadcasts over lanes.
    s = jnp.maximum(acc + b_ref[...], 0.0)     # (C, TP) f32

    # psi: 1x1 conv down to 1 channel == multiply + sublane reduce (keeps a
    # 1-wide-output matmul off the MXU); bias + sigmoid run on the EUP.
    psi = jnp.sum(s * wpsi_ref[...], axis=0, keepdims=True) + bpsi_ref[...]
    psi = jax.nn.sigmoid(psi)                  # (1, TP) f32

    # attn = x * psi, broadcast over the channel (sublane) axis.  Keep the
    # multiply in the input dtype when it is sub-32-bit (halves elementwise
    # traffic on v6e/v7x; Mosaic upcasts internally on v5e).
    if jnp.dtype(x_ref.dtype) == jnp.dtype(jnp.float32):
        out_ref[0] = (x * psi).astype(out_ref.dtype)
    else:
        out_ref[0] = (x * psi.astype(x_ref.dtype)).astype(out_ref.dtype)


def _vmem_caps():
    """(vmem_limit_bytes, tile_budget_bytes) — generation aware with fallback."""
    try:
        info = pltpu.get_tpu_info()
        cap = int(getattr(info, "vmem_capacity_bytes", 64 * 1024 * 1024))
    except Exception:  # pragma: no cover - conservative fallback off-TPU
        cap = 64 * 1024 * 1024
    # <= ~48 MiB on v7x (64 MiB physical), 64 MiB on v5e/v6e (128 MiB physical).
    limit = min(64 * 1024 * 1024, (cap * 3) // 4)
    budget = limit // 2  # headroom for double-buffering + f32 temporaries
    return limit, budget


def _choose_tp(P_pad, C, itemsize, n_batch, vmem_budget_bytes,
               min_grid_steps=4):
    """Largest 128-multiple pixel tile that (a) fits the VMEM budget counting
    the f32 in-kernel temporaries and (b) still leaves >= min_grid_steps total
    grid steps so the Pallas pipeline overlaps DMA with compute (and the grid
    can be split across both v7x TensorCores)."""
    # double-buffered g/x/out tiles (native dtype) + ~4 f32 "C-rows" per lane
    # of temporaries (acc, s, psi, upcast copies).
    per_lane = 6 * C * itemsize + 4 * C * 4
    max_tp_vmem = max(128, (vmem_budget_bytes // per_lane) // 128 * 128)
    tiles_needed = max(1, -(-min_grid_steps // max(n_batch, 1)))   # ceil div
    max_tp_steps = max(128, (P_pad // tiles_needed) // 128 * 128)
    tp = min(max_tp_vmem, max_tp_steps, P_pad)
    tp = max(128, tp - tp % 128)
    while P_pad % tp != 0:
        tp -= 128
    return tp


def attention_gate_pallas(g_nchw, x_nchw, params, *, tp=None,
                          vpu_max_channels=4,
                          mxu_precision=jax.lax.Precision.HIGH):
    """AttentionGate forward.  g, x: (N, C, H, W) with identical shapes."""
    N, C, H, W = g_nchw.shape
    assert x_nchw.shape == g_nchw.shape
    P = H * W

    wg, wx, b_sum, wpsi_col, bpsi = params

    # NCHW -> (N, C, P): free reshape, no transpose / extra HBM traffic.
    g3 = g_nchw.reshape(N, C, P)
    x3 = x_nchw.reshape(N, C, P)

    # Zero-pad the pixel axis to a multiple of 128 so every store is
    # lane-dense (no vst.msk partial stores) and tiling stays uniform.
    P_pad = -(-P // 128) * 128
    if P_pad != P:
        pad = ((0, 0), (0, 0), (0, P_pad - P))
        g3 = jnp.pad(g3, pad)
        x3 = jnp.pad(x3, pad)

    vmem_limit, vmem_budget = _vmem_caps()
    if tp is None:
        tp = _choose_tp(P_pad, C, jnp.dtype(g_nchw.dtype).itemsize, N,
                        vmem_budget)
    num_tp = P_pad // tp

    channel_mix = "vpu" if C <= vpu_max_channels else "mxu"
    kernel = functools.partial(_attention_gate_kernel,
                               channel_mix=channel_mix,
                               mxu_precision=mxu_precision)

    tile_spec = pl.BlockSpec((1, C, tp), lambda n, p: (n, 0, p))
    const = lambda a: pl.BlockSpec(a.shape, lambda n, p: (0,) * a.ndim)

    out3 = pl.pallas_call(
        kernel,
        out_shape=jax.ShapeDtypeStruct((N, C, P_pad), x_nchw.dtype),
        grid_spec=pltpu.PrefetchScalarGridSpec(
            num_scalar_prefetch=0,
            grid=(N, num_tp),
            in_specs=[
                tile_spec,              # g tile  (1, C, TP)
                tile_spec,              # x tile  (1, C, TP)
                const(wg),              # (C, C)  BN-folded w_g
                const(wx),              # (C, C)  BN-folded w_x
                const(b_sum),           # (C, 1)  f32, bg + bx
                const(wpsi_col),        # (C, 1)  f32
                const(bpsi),            # (1, 1)  f32
            ],
            out_specs=tile_spec,
        ),
        compiler_params=pltpu.CompilerParams(
            dimension_semantics=("parallel", "parallel"),
            vmem_limit_bytes=vmem_limit),
    )(g3, x3, wg, wx, b_sum, wpsi_col, bpsi)

    if P_pad != P:
        out3 = out3[:, :, :P]
    return out3.reshape(N, C, H, W)


def init_attention_gate_params(key, in_channels, dtype=jnp.float32, eps=1e-5):
    """Conv2d(C,C,1)/Conv2d(C,1,1) weights+biases with BatchNorm (inference:
    gamma=1, beta=0, running_mean=0, running_var=1) folded in."""
    C = in_channels
    k = 1.0 / (C ** 0.5)
    keys = jax.random.split(key, 6)

    wg = jax.random.uniform(keys[0], (C, C), dtype, -k, k)   # (C_out, C_in)
    bg = jax.random.uniform(keys[1], (C,), dtype, -k, k)
    wx = jax.random.uniform(keys[2], (C, C), dtype, -k, k)
    bx = jax.random.uniform(keys[3], (C,), dtype, -k, k)
    wpsi = jax.random.uniform(keys[4], (1, C), dtype, -k, k)
    bpsi = jax.random.uniform(keys[5], (1,), dtype, -k, k)

    def fold_bn(w, b, c_out):
        gamma = jnp.ones((c_out,), dtype)
        beta = jnp.zeros((c_out,), dtype)
        mean = jnp.zeros((c_out,), dtype)
        var = jnp.ones((c_out,), dtype)
        scale = gamma / jnp.sqrt(var + eps)
        return w * scale[:, None], scale * (b - mean) + beta

    wg_eff, bg_eff = fold_bn(wg, bg, C)
    wx_eff, bx_eff = fold_bn(wx, bx, C)
    wpsi_eff, bpsi_eff = fold_bn(wpsi, bpsi, 1)
    return (wg_eff, bg_eff, wx_eff, bx_eff, wpsi_eff, bpsi_eff)


def pack_kernel_params(folded, activation_dtype=jnp.float32):
    """Package BN-folded per-layer params for the kernel.  Conv weights are
    stored in the activation dtype (so the MXU sees matching operand dtypes);
    small per-channel constants stay f32 (added to the f32 accumulator)."""
    wg, bg, wx, bx, wpsi, bpsi = folded
    C = wg.shape[0]
    wg_k = wg.astype(activation_dtype)                       # (C, C)
    wx_k = wx.astype(activation_dtype)                       # (C, C)
    b_sum = (bg + bx).astype(jnp.float32).reshape(C, 1)      # (C, 1)
    wpsi_col = wpsi.astype(jnp.float32).reshape(C, 1)        # (C, 1)
    bpsi2 = bpsi.astype(jnp.float32).reshape(1, 1)           # (1, 1)
    return (wg_k, wx_k, b_sum, wpsi_col, bpsi2)


def attention_gate_reference(g, x, folded):
    """Pure-JAX NCHW reference with the same BN-folded parametrization."""
    wg, bg, wx, bx, wpsi, bpsi = folded
    hp = jax.lax.Precision.HIGHEST
    g1 = jnp.einsum("oc,nchw->nohw", wg, g, precision=hp) + bg[None, :, None, None]
    x1 = jnp.einsum("oc,nchw->nohw", wx, x, precision=hp) + bx[None, :, None, None]
    s = jnp.maximum(g1 + x1, 0.0)
    psi = jnp.einsum("oc,nchw->nohw", wpsi, s, precision=hp) + bpsi[None, :, None, None]
    return x * jax.nn.sigmoid(psi)


if __name__ == "__main__":
    key = jax.random.PRNGKey(0)

    # Case 1: tiny channel count -> VPU channel-mix path.
    k_params, k_g, k_x, key = jax.random.split(key, 4)
    N, C, H, W = 2, 4, 16, 16
    folded = init_attention_gate_params(k_params, C)
    kparams = pack_kernel_params(folded)
    g = jax.random.normal(k_g, (N, C, H, W), jnp.float32)
    x = jax.random.normal(k_x, (N, C, H, W), jnp.float32)

    out = jax.block_until_ready(attention_gate_pallas(g, x, kparams))
    ref = attention_gate_reference(g, x, folded)
    assert out.shape == (N, C, H, W)
    assert jnp.allclose(out, ref, atol=1e-4, rtol=1e-4), "mismatch (VPU path)"

    # Case 2: larger channel count -> MXU channel-mix path (two dots, no concat).
    k_params2, k_g2, k_x2, key = jax.random.split(key, 4)
    N2, C2, H2, W2 = 1, 64, 16, 16
    folded2 = init_attention_gate_params(k_params2, C2)
    kparams2 = pack_kernel_params(folded2)
    g2 = jax.random.normal(k_g2, (N2, C2, H2, W2), jnp.float32)
    x2 = jax.random.normal(k_x2, (N2, C2, H2, W2), jnp.float32)

    out2 = jax.block_until_ready(attention_gate_pallas(g2, x2, kparams2))
    ref2 = attention_gate_reference(g2, x2, folded2)
    assert out2.shape == (N2, C2, H2, W2)
    assert jnp.allclose(out2, ref2, atol=1e-4, rtol=1e-4), "mismatch (MXU path)"

    # Case 3: ragged spatial size (H*W not a multiple of 128) -> zero-pad path.
    k_params3, k_g3, k_x3 = jax.random.split(key, 3)
    N3, C3, H3, W3 = 2, 4, 9, 9
    folded3 = init_attention_gate_params(k_params3, C3)
    kparams3 = pack_kernel_params(folded3)
    g3 = jax.random.normal(k_g3, (N3, C3, H3, W3), jnp.float32)
    x3 = jax.random.normal(k_x3, (N3, C3, H3, W3), jnp.float32)

    out3 = jax.block_until_ready(attention_gate_pallas(g3, x3, kparams3))
    ref3 = attention_gate_reference(g3, x3, folded3)
    assert out3.shape == (N3, C3, H3, W3)
    assert jnp.allclose(out3, ref3, atol=1e-4, rtol=1e-4), "mismatch (pad path)"

    print("KERNEL_OK")
</pallas_src>

<mosaic_0001>
module attributes {stable_mosaic.version = 11 : i64} {
  func.func @_attention_gate_kernel(%arg0: i32, %arg1: i32, %arg2: memref<1x4x128xf32, #tpu.memory_space<vmem>>, %arg3: memref<1x4x128xf32, #tpu.memory_space<vmem>>, %arg4: memref<4x4xf32, #tpu.memory_space<vmem>>, %arg5: memref<4x4xf32, #tpu.memory_space<vmem>>, %arg6: memref<4x1xf32, #tpu.memory_space<vmem>>, %arg7: memref<4x1xf32, #tpu.memory_space<vmem>>, %arg8: memref<1x1xf32, #tpu.memory_space<vmem>>, %arg9: memref<1x4x128xf32, #tpu.memory_space<vmem>>) attributes {dimension_semantics = [#tpu.dimension_semantics<parallel>, #tpu.dimension_semantics<parallel>], iteration_bounds = array<i64: 2, 2>, scalar_prefetch = 0 : i64, scratch_operands = 0 : i64, tpu.core_type = #tpu.core_type<tc>, window_params = [{transform_indices = @transform_0, window_bounds = array<i64: 1, 4, 128>}, {transform_indices = @transform_1, window_bounds = array<i64: 1, 4, 128>}, {pipeline_mode = #tpu.pipeline_mode<synchronous>, transform_indices = @transform_2, window_bounds = array<i64: 4, 4>}, {pipeline_mode = #tpu.pipeline_mode<synchronous>, transform_indices = @transform_3, window_bounds = array<i64: 4, 4>}, {pipeline_mode = #tpu.pipeline_mode<synchronous>, transform_indices = @transform_4, window_bounds = array<i64: 4, 1>}, {pipeline_mode = #tpu.pipeline_mode<synchronous>, transform_indices = @transform_5, window_bounds = array<i64: 4, 1>}, {pipeline_mode = #tpu.pipeline_mode<synchronous>, transform_indices = @transform_6, window_bounds = array<i64: 1, 1>}, {transform_indices = @transform_7, window_bounds = array<i64: 1, 4, 128>}]} {
    %c0 = arith.constant 0 : index
    %c0_0 = arith.constant 0 : index
    %c0_1 = arith.constant 0 : index
    %0 = vector.load %arg2[%c0, %c0_0, %c0_1] : memref<1x4x128xf32, #tpu.memory_space<vmem>>, vector<1x4x128xf32>
    %1 = vector.shape_cast %0 : vector<1x4x128xf32> to vector<4x128xf32>
    %c0_2 = arith.constant 0 : index
    %c0_3 = arith.constant 0 : index
    %c0_4 = arith.constant 0 : index
    %2 = vector.load %arg3[%c0_2, %c0_3, %c0_4] : memref<1x4x128xf32, #tpu.memory_space<vmem>>, vector<1x4x128xf32>
    %3 = vector.shape_cast %2 : vector<1x4x128xf32> to vector<4x128xf32>
    %c0_5 = arith.constant 0 : index
    %c0_6 = arith.constant 0 : index
    %4 = vector.load %arg4[%c0_5, %c0_6] : memref<4x4xf32, #tpu.memory_space<vmem>>, vector<4x4xf32>
    %c0_7 = arith.constant 0 : index
    %c0_8 = arith.constant 0 : index
    %5 = vector.load %arg5[%c0_7, %c0_8] : memref<4x4xf32, #tpu.memory_space<vmem>>, vector<4x4xf32>
    %6 = vector.extract_strided_slice %4 {offsets = [0, 0], sizes = [4, 1], strides = [1, 1]} : vector<4x4xf32> to vector<4x1xf32>
    %7 = vector.extract_strided_slice %1 {offsets = [0, 0], sizes = [1, 128], strides = [1, 1]} : vector<4x128xf32> to vector<1x128xf32>
    %8 = vector.broadcast %6 : vector<4x1xf32> to vector<4x128xf32>
    %9 = vector.broadcast %7 : vector<1x128xf32> to vector<4x128xf32>
    %10 = arith.mulf %8, %9 : vector<4x128xf32>
    %11 = vector.extract_strided_slice %5 {offsets = [0, 0], sizes = [4, 1], strides = [1, 1]} : vector<4x4xf32> to vector<4x1xf32>
    %12 = vector.extract_strided_slice %3 {offsets = [0, 0], sizes = [1, 128], strides = [1, 1]} : vector<4x128xf32> to vector<1x128xf32>
    %13 = vector.broadcast %11 : vector<4x1xf32> to vector<4x128xf32>
    %14 = vector.broadcast %12 : vector<1x128xf32> to vector<4x128xf32>
    %15 = arith.mulf %13, %14 : vector<4x128xf32>
    %16 = arith.addf %10, %15 : vector<4x128xf32>
    %17 = vector.extract_strided_slice %4 {offsets = [0, 1], sizes = [4, 1], strides = [1, 1]} : vector<4x4xf32> to vector<4x1xf32>
    %18 = vector.extract_strided_slice %1 {offsets = [1, 0], sizes = [1, 128], strides = [1, 1]} : vector<4x128xf32> to vector<1x128xf32>
    %19 = vector.broadcast %17 : vector<4x1xf32> to vector<4x128xf32>
    %20 = vector.broadcast %18 : vector<1x128xf32> to vector<4x128xf32>
    %21 = arith.mulf %19, %20 : vector<4x128xf32>
    %22 = arith.addf %16, %21 : vector<4x128xf32>
    %23 = vector.extract_strided_slice %5 {offsets = [0, 1], sizes = [4, 1], strides = [1, 1]} : vector<4x4xf32> to vector<4x1xf32>
    %24 = vector.extract_strided_slice %3 {offsets = [1, 0], sizes = [1, 128], strides = [1, 1]} : vector<4x128xf32> to vector<1x128xf32>
    %25 = vector.broadcast %23 : vector<4x1xf32> to vector<4x128xf32>
    %26 = vector.broadcast %24 : vector<1x128xf32> to vector<4x128xf32>
    %27 = arith.mulf %25, %26 : vector<4x128xf32>
    %28 = arith.addf %22, %27 : vector<4x128xf32>
    %29 = vector.extract_strided_slice %4 {offsets = [0, 2], sizes = [4, 1], strides = [1, 1]} : vector<4x4xf32> to vector<4x1xf32>
    %30 = vector.extract_strided_slice %1 {offsets = [2, 0], sizes = [1, 128], strides = [1, 1]} : vector<4x128xf32> to vector<1x128xf32>
    %31 = vector.broadcast %29 : vector<4x1xf32> to vector<4x128xf32>
    %32 = vector.broadcast %30 : vector<1x128xf32> to vector<4x128xf32>
    %33 = arith.mulf %31, %32 : vector<4x128xf32>
    %34 = arith.addf %28, %33 : vector<4x128xf32>
    %35 = vector.extract_strided_slice %5 {offsets = [0, 2], sizes = [4, 1], strides = [1, 1]} : vector<4x4xf32> to vector<4x1xf32>
    %36 = vector.extract_strided_slice %3 {offsets = [2, 0], sizes = [1, 128], strides = [1, 1]} : vector<4x128xf32> to vector<1x128xf32>
    %37 = vector.broadcast %35 : vector<4x1xf32> to vector<4x128xf32>
    %38 = vector.broadcast %36 : vector<1x128xf32> to vector<4x128xf32>
    %39 = arith.mulf %37, %38 : vector<4x128xf32>
    %40 = arith.addf %34, %39 : vector<4x128xf32>
    %41 = vector.extract_strided_slice %4 {offsets = [0, 3], sizes = [4, 1], strides = [1, 1]} : vector<4x4xf32> to vector<4x1xf32>
    %42 = vector.extract_strided_slice %1 {offsets = [3, 0], sizes = [1, 128], strides = [1, 1]} : vector<4x128xf32> to vector<1x128xf32>
    %43 = vector.broadcast %41 : vector<4x1xf32> to vector<4x128xf32>
    %44 = vector.broadcast %42 : vector<1x128xf32> to vector<4x128xf32>
    %45 = arith.mulf %43, %44 : vector<4x128xf32>
    %46 = arith.addf %40, %45 : vector<4x128xf32>
    %47 = vector.extract_strided_slice %5 {offsets = [0, 3], sizes = [4, 1], strides = [1, 1]} : vector<4x4xf32> to vector<4x1xf32>
    %48 = vector.extract_strided_slice %3 {offsets = [3, 0], sizes = [1, 128], strides = [1, 1]} : vector<4x128xf32> to vector<1x128xf32>
    %49 = vector.broadcast %47 : vector<4x1xf32> to vector<4x128xf32>
    %50 = vector.broadcast %48 : vector<1x128xf32> to vector<4x128xf32>
    %51 = arith.mulf %49, %50 : vector<4x128xf32>
    %52 = arith.addf %46, %51 : vector<4x128xf32>
    %c0_9 = arith.constant 0 : index
    %c0_10 = arith.constant 0 : index
    %53 = vector.load %arg6[%c0_9, %c0_10] : memref<4x1xf32, #tpu.memory_space<vmem>>, vector<4x1xf32>
    %54 = vector.broadcast %53 : vector<4x1xf32> to vector<4x128xf32>
    %55 = arith.addf %52, %54 : vector<4x128xf32>
    %cst = arith.constant 0.000000e+00 : f32
    %56 = vector.broadcast %cst : f32 to vector<4x128xf32>
    %57 = arith.maximumf %55, %56 : vector<4x128xf32>
    %c0_11 = arith.constant 0 : index
    %c0_12 = arith.constant 0 : index
    %58 = vector.load %arg7[%c0_11, %c0_12] : memref<4x1xf32, #tpu.memory_space<vmem>>, vector<4x1xf32>
    %59 = vector.broadcast %58 : vector<4x1xf32> to vector<4x128xf32>
    %60 = arith.mulf %57, %59 : vector<4x128xf32>
    %cst_13 = arith.constant dense<0.000000e+00> : vector<128xf32>
    %61 = vector.multi_reduction <add>, %60, %cst_13 [0] : vector<4x128xf32> to vector<128xf32>
    %62 = vector.shape_cast %61 : vector<128xf32> to vector<1x128xf32>
    %c0_14 = arith.constant 0 : index
    %c0_15 = arith.constant 0 : index
    %63 = vector.load %arg8[%c0_14, %c0_15] : memref<1x1xf32, #tpu.memory_space<vmem>>, vector<1x1xf32>
    %64 = vector.broadcast %63 : vector<1x1xf32> to vector<1x128xf32>
    %65 = arith.addf %62, %64 : vector<1x128xf32>
    %66 = arith.negf %65 : vector<1x128xf32>
    %67 = math.exp %66 : vector<1x128xf32>
    %cst_16 = arith.constant 1.000000e+00 : f32
    %68 = vector.broadcast %cst_16 : f32 to vector<1x128xf32>
    %69 = arith.addf %68, %67 : vector<1x128xf32>
    %70 = arith.divf %68, %69 : vector<1x128xf32>
    %71 = vector.broadcast %70 : vector<1x128xf32> to vector<4x128xf32>
    %72 = arith.mulf %3, %71 : vector<4x128xf32>
    %c0_17 = arith.constant 0 : index
    %c0_18 = arith.constant 0 : index
    %c0_19 = arith.constant 0 : index
    %73 = vector.load %arg9[%c0_17, %c0_18, %c0_19] : memref<1x4x128xf32, #tpu.memory_space<vmem>>, vector<1x4x128xf32>
    %74 = vector.shape_cast %73 : vector<1x4x128xf32> to vector<4x128xf32>
    %75 = vector.shape_cast %72 : vector<4x128xf32> to vector<1x4x128xf32>
    tpu.vector_store %arg9[%c0_17, %c0_18, %c0_19], %75 {strides = array<i32>} : memref<1x4x128xf32, #tpu.memory_space<vmem>>, vector<1x4x128xf32>,
    return
  }
  func.func @transform_0(%arg0: i32, %arg1: i32) -> (i32, i32, i32) {
    %c0_i32 = arith.constant 0 : i32
    %c0_i32_0 = arith.constant 0 : i32
    return %arg0, %c0_i32, %arg1 : i32, i32, i32
  }
  func.func @transform_1(%arg0: i32, %arg1: i32) -> (i32, i32, i32) {
    %c0_i32 = arith.constant 0 : i32
    %c0_i32_0 = arith.constant 0 : i32
    return %arg0, %c0_i32, %arg1 : i32, i32, i32
  }
  func.func @transform_2(%arg0: i32, %arg1: i32) -> (i32, i32) {
    %c0_i32 = arith.constant 0 : i32
    %c0_i32_0 = arith.constant 0 : i32
    %c0_i32_1 = arith.constant 0 : i32
    return %c0_i32, %c0_i32_0 : i32, i32
  }
  func.func @transform_3(%arg0: i32, %arg1: i32) -> (i32, i32) {
    %c0_i32 = arith.constant 0 : i32
    %c0_i32_0 = arith.constant 0 : i32
    %c0_i32_1 = arith.constant 0 : i32
    return %c0_i32, %c0_i32_0 : i32, i32
  }
  func.func @transform_4(%arg0: i32, %arg1: i32) -> (i32, i32) {
    %c0_i32 = arith.constant 0 : i32
    %c0_i32_0 = arith.constant 0 : i32
    %c0_i32_1 = arith.constant 0 : i32
    return %c0_i32, %c0_i32_0 : i32, i32
  }
  func.func @transform_5(%arg0: i32, %arg1: i32) -> (i32, i32) {
    %c0_i32 = arith.constant 0 : i32
    %c0_i32_0 = arith.constant 0 : i32
    %c0_i32_1 = arith.constant 0 : i32
    return %c0_i32, %c0_i32_0 : i32, i32
  }
  func.func @transform_6(%arg0: i32, %arg1: i32) -> (i32, i32) {
    %c0_i32 = arith.constant 0 : i32
    %c0_i32_0 = arith.constant 0 : i32
    %c0_i32_1 = arith.constant 0 : i32
    return %c0_i32, %c0_i32_0 : i32, i32
  }
  func.func @transform_7(%arg0: i32, %arg1: i32) -> (i32, i32, i32) {
    %c0_i32 = arith.constant 0 : i32
    %c0_i32_0 = arith.constant 0 : i32
    return %arg0, %c0_i32, %arg1 : i32, i32, i32
  }
}

</mosaic_0001>

<llo_original>
// kernel: tpu_custom_call.1
$region0: #{tpu_custom_call.1}
  #allocation0 [shape = 'u32[]', space=smem, size = 0x4, offset = 0x4, fixed_abs, tag = 'smem constant byte address 0x4 - core index']
  #allocation1 [shape = 'u32[144,128]{1,0:T(1,128)}', space=vmem, size = 0x12000, scoped, tag = 'internal scratch']
  #allocation2 [shape = 'f32[1,1]{1,0:T(1,128)S(1)}', space=vmem, size = 0x200, scoped, tag = 'scoped memory for tpu_custom_call.1']
  %s0 = inlined_call_operand.hbm [shape: f32[2,4,256], index: 0, kind: input, shape index: {}]
  %s1 = inlined_call_operand.hbm [shape: f32[2,4,256], index: 1, kind: input, shape index: {}]
  %s2 = inlined_call_operand.vmem [shape: f32[4,4], index: 2, kind: input, shape index: {}]
  %s3 = inlined_call_operand.vmem [shape: f32[4,4], index: 3, kind: input, shape index: {}]
  %s4 = inlined_call_operand.vmem [shape: f32[4,1], index: 4, kind: input, shape index: {}]
  %s5 = inlined_call_operand.vmem [shape: f32[4,1], index: 5, kind: input, shape index: {}]
  %s6 = inlined_call_operand.<no memory space> [shape: f32[1,1], index: 6, kind: input, shape index: {}]
  %s7 = inlined_call_operand.hbm [shape: f32[2,4,256], index: 7, kind: output, shape index: {}]
  %s8 = sld [smem:[#allocation0]]
  $region69: #{tpu_custom_call.1} parent=0
    _
  %s10 = ssub.s32 1, %s8
  %s11 = scalar_select 0, %s10, %s8
  %v12 = vstv %s6
  %13 = vst [vmem:[#allocation2] sm:$0x1] %v12
  $region1: #{tpu_custom_call.1} parent=0
    #allocation3 [shape = 'u8[4096]{0}', space=vmem, size = 0x1000, scoped, tag = 'input window, operand 0']
    #allocation4 [shape = 's32[2]{0}', space=sflag, size = 0x8, scoped, tag = 'scoped memory for tpu_custom_call.1']
    #allocation5 [shape = 's32[2]{0}', space=sflag, size = 0x8, scoped, tag = 'scoped memory for tpu_custom_call.1']
    #allocation6 [shape = 'u8[4096]{0}', space=vmem, size = 0x1000, scoped, tag = 'input window, operand 1']
    #allocation7 [shape = 's32[2]{0}', space=sflag, size = 0x8, scoped, tag = 'scoped memory for tpu_custom_call.1']
    #allocation8 [shape = 'u8[4096]{0}', space=vmem, size = 0x1000, scoped, tag = 'output window, operand 0']
    %14 = vsyncpa [#allocation4], 0
    %s15 = scalar_lea.sflag [#allocation4], 1
    %16 = vsyncpa %s15, 0
    %17 = vsyncpa [#allocation7], 0
    %s18 = scalar_lea.sflag [#allocation7], 1
    %19 = vsyncpa %s18, 0
    %20 = vsyncpa [#allocation5], 0
    %s21 = scalar_lea.sflag [#allocation5], 1
    %22 = vsyncpa %s21, 0
    loop: start=0, step=1, limit=6
    $region2: #{tpu_custom_call.1} parent=1 // loop_pre_header
      _
    $region3: #{tpu_custom_call.1} parent=1 // loop_header
      %s24 = sphi 0, %s28
      %p25 = scmp.ge.s32.totalorder %s24, 6
      %s31 = sphi 0, %s43
      %s32 = sphi 0, %s39
      %s33 = sphi 0, %s31
      %s34 = sphi 0, %s32
      %s35 = sphi 0, %s33
      %s36 = sphi 0, %s34
      %s48 = sphi 0, %s50
      %s51 = sphi 0, %s48
      %s52 = sphi 0, %s51
      %s68 = sphi 0, %s52
      %s76 = sphi 0, %s78
      %s79 = sphi 0, %s76
      %s80 = sphi 0, %s79
      %s96 = sphi 0, %s80
      %s100 = sphi 0, %s100
      %s102 = sphi 0, %s100
      %s103 = sphi 0, %s102
      %s117 = sphi 0, %s103
      %s121 = sphi 0, %s121
      %s123 = sphi 0, %s121
      %s124 = sphi 0, %s123
      %s138 = sphi 0, %s124
      %s142 = sphi 0, %s142
      %s144 = sphi 0, %s142
      %s145 = sphi 0, %s144
      %s159 = sphi 0, %s145
      %s163 = sphi 0, %s163
      %s165 = sphi 0, %s163
      %s166 = sphi 0, %s165
      %s180 = sphi 0, %s166
      %s184 = sphi 0, %s184
      %s186 = sphi 0, %s184
      %s187 = sphi 0, %s186
      %s201 = sphi 0, %s187
      %s209 = sphi 0, %s211
      %s212 = sphi 0, %s209
      %s213 = sphi 0, %s212
      %s229 = sphi 0, %s213
    $region4: #{tpu_custom_call.1} parent=1 // loop_header_branch
      %27 = sbr.rel (%p25) target = $region8
    $region5: #{tpu_custom_call.1} parent=1 // loop_body
      %s29 = ssub.s32 %s24, 1
      %s30 = ssub.s32 %s24, 2
      %s37 = sadd.s32 1, %s32
      %p38 = scmp.ge.s32.totalorder %s37, 2
      %s39 = scalar_select %p38, 0, %s37
      %s40 = sadd.s32 1, %s31
      %s41 = scalar_select %p38, %s40, %s31
      %p42 = scmp.ge.s32.totalorder %s41, 2
      %s43 = scalar_select %p42, 0, %s41
      %s44 = ssub.s32 %s31, %s43
      %s45 = ssub.s32 %s32, %s39
      %s46 = sor.u32 %s44, %s45
      %p47 = scmp.eq.s32.totalorder %s46, 0
      %s49 = sadd.s32 %s48, 1
      %s50 = scalar_select %p47, %s48, %s49
      %p53 = pneg %p47
      %p54 = scmp.eq.s32.totalorder %s24, 3
      %p55 = por %p53, %p54
      %p56 = scmp.ne.s32.totalorder %s48, %s51
      %p57 = scmp.eq.s32.totalorder %s24, 0
      %p58 = por %p56, %p57
      %p59 = scmp.ne.s32.totalorder %s48, %s51
      %p60 = scmp.eq.s32.totalorder %s29, 3
      %p61 = por %p59, %p60
      %p62 = scmp.ne.s32.totalorder %s51, %s52
      %p63 = scmp.eq.s32.totalorder %s29, 0
      %p64 = por %p62, %p63
      %p65 = scmp.ne.s32.totalorder %s51, %s52
      %p66 = scmp.eq.s32.totalorder %s30, 3
      %p67 = por %p65, %p66
      %p69 = scmp.ne.s32.totalorder %s52, %s68
      %p70 = scmp.eq.s32.totalorder %s30, 0
      %p71 = por %p69, %p70
      %s72 = ssub.s32 %s31, %s43
      %s73 = ssub.s32 %s32, %s39
      %s74 = sor.u32 %s72, %s73
      %p75 = scmp.eq.s32.totalorder %s74, 0
      %s77 = sadd.s32 %s76, 1
      %s78 = scalar_select %p75, %s76, %s77
      %p81 = pneg %p75
      %p82 = scmp.eq.s32.totalorder %s24, 3
      %p83 = por %p81, %p82
      %p84 = scmp.ne.s32.totalorder %s76, %s79
      %p85 = scmp.eq.s32.totalorder %s24, 0
      %p86 = por %p84, %p85
      %p87 = scmp.ne.s32.totalorder %s76, %s79
      %p88 = scmp.eq.s32.totalorder %s29, 3
      %p89 = por %p87, %p88
      %p90 = scmp.ne.s32.totalorder %s79, %s80
      %p91 = scmp.eq.s32.totalorder %s29, 0
      %p92 = por %p90, %p91
      %p93 = scmp.ne.s32.totalorder %s79, %s80
      %p94 = scmp.eq.s32.totalorder %s30, 3
      %p95 = por %p93, %p94
      %p97 = scmp.ne.s32.totalorder %s80, %s96
      %p98 = scmp.eq.s32.totalorder %s30, 0
      %p99 = por %p97, %p98
      %s101 = sadd.s32 %s100, 1
      %p104 = scmp.eq.s32.totalorder %s24, 3
      %p105 = scmp.ne.s32.totalorder %s100, %s102
      %p106 = scmp.eq.s32.totalorder %s24, 0
      %p107 = por %p105, %p106
      %p108 = scmp.ne.s32.totalorder %s100, %s102
      %p109 = scmp.eq.s32.totalorder %s29, 3
      %p110 = por %p108, %p109
      %p111 = scmp.ne.s32.totalorder %s102, %s103
      %p112 = scmp.eq.s32.totalorder %s29, 0
      %p113 = por %p111, %p112
      %p114 = scmp.ne.s32.totalorder %s102, %s103
      %p115 = scmp.eq.s32.totalorder %s30, 3
      %p116 = por %p114, %p115
      %p118 = scmp.ne.s32.totalorder %s103, %s117
      %p119 = scmp.eq.s32.totalorder %s30, 0
      %p120 = por %p118, %p119
      %s122 = sadd.s32 %s121, 1
      %p125 = scmp.eq.s32.totalorder %s24, 3
      %p126 = scmp.ne.s32.totalorder %s121, %s123
      %p127 = scmp.eq.s32.totalorder %s24, 0
      %p128 = por %p126, %p127
      %p129 = scmp.ne.s32.totalorder %s121, %s123
      %p130 = scmp.eq.s32.totalorder %s29, 3
      %p131 = por %p129, %p130
      %p132 = scmp.ne.s32.totalorder %s123, %s124
      %p133 = scmp.eq.s32.totalorder %s29, 0
      %p134 = por %p132, %p133
      %p135 = scmp.ne.s32.totalorder %s123, %s124
      %p136 = scmp.eq.s32.totalorder %s30, 3
      %p137 = por %p135, %p136
      %p139 = scmp.ne.s32.totalorder %s124, %s138
      %p140 = scmp.eq.s32.totalorder %s30, 0
      %p141 = por %p139, %p140
      %s143 = sadd.s32 %s142, 1
      %p146 = scmp.eq.s32.totalorder %s24, 3
      %p147 = scmp.ne.s32.totalorder %s142, %s144
      %p148 = scmp.eq.s32.totalorder %s24, 0
      %p149 = por %p147, %p148
      %p150 = scmp.ne.s32.totalorder %s142, %s144
      %p151 = scmp.eq.s32.totalorder %s29, 3
      %p152 = por %p150, %p151
      %p153 = scmp.ne.s32.totalorder %s144, %s145
      %p154 = scmp.eq.s32.totalorder %s29, 0
      %p155 = por %p153, %p154
      %p156 = scmp.ne.s32.totalorder %s144, %s145
      %p157 = scmp.eq.s32.totalorder %s30, 3
      %p158 = por %p156, %p157
      %p160 = scmp.ne.s32.totalorder %s145, %s159
      %p161 = scmp.eq.s32.totalorder %s30, 0
      %p162 = por %p160, %p161
      %s164 = sadd.s32 %s163, 1
      %p167 = scmp.eq.s32.totalorder %s24, 3
      %p168 = scmp.ne.s32.totalorder %s163, %s165
      %p169 = scmp.eq.s32.totalorder %s24, 0
      %p170 = por %p168, %p169
      %p171 = scmp.ne.s32.totalorder %s163, %s165
      %p172 = scmp.eq.s32.totalorder %s29, 3
      %p173 = por %p171, %p172
      %p174 = scmp.ne.s32.totalorder %s165, %s166
      %p175 = scmp.eq.s32.totalorder %s29, 0
      %p176 = por %p174, %p175
      %p177 = scmp.ne.s32.totalorder %s165, %s166
      %p178 = scmp.eq.s32.totalorder %s30, 3
      %p179 = por %p177, %p178
      %p181 = scmp.ne.s32.totalorder %s166, %s180
      %p182 = scmp.eq.s32.totalorder %s30, 0
      %p183 = por %p181, %p182
      %s185 = sadd.s32 %s184, 1
      %p188 = scmp.eq.s32.totalorder %s24, 3
      %p189 = scmp.ne.s32.totalorder %s184, %s186
      %p190 = scmp.eq.s32.totalorder %s24, 0
      %p191 = por %p189, %p190
      %p192 = scmp.ne.s32.totalorder %s184, %s186
      %p193 = scmp.eq.s32.totalorder %s29, 3
      %p194 = por %p192, %p193
      %p195 = scmp.ne.s32.totalorder %s186, %s187
      %p196 = scmp.eq.s32.totalorder %s29, 0
      %p197 = por %p195, %p196
      %p198 = scmp.ne.s32.totalorder %s186, %s187
      %p199 = scmp.eq.s32.totalorder %s30, 3
      %p200 = por %p198, %p199
      %p202 = scmp.ne.s32.totalorder %s187, %s201
      %p203 = scmp.eq.s32.totalorder %s30, 0
      %p204 = por %p202, %p203
      %s205 = ssub.s32 %s31, %s43
      %s206 = ssub.s32 %s32, %s39
      %s207 = sor.u32 %s205, %s206
      %p208 = scmp.eq.s32.totalorder %s207, 0
      %s210 = sadd.s32 %s209, 1
      %s211 = scalar_select %p208, %s209, %s210
      %p214 = pneg %p208
      %p215 = scmp.eq.s32.totalorder %s24, 3
      %p216 = por %p214, %p215
      %p217 = scmp.ne.s32.totalorder %s209, %s212
      %p218 = scmp.eq.s32.totalorder %s24, 0
      %p219 = por %p217, %p218
      %p220 = scmp.ne.s32.totalorder %s209, %s212
      %p221 = scmp.eq.s32.totalorder %s29, 3
      %p222 = por %p220, %p221
      %p223 = scmp.ne.s32.totalorder %s212, %s213
      %p224 = scmp.eq.s32.totalorder %s29, 0
      %p225 = por %p223, %p224
      %p226 = scmp.ne.s32.totalorder %s212, %s213
      %p227 = scmp.eq.s32.totalorder %s30, 3
      %p228 = por %p226, %p227
      %p230 = scmp.ne.s32.totalorder %s213, %s229
      %p231 = scmp.eq.s32.totalorder %s30, 0
      %p232 = por %p230, %p231
      %p233 = scmp.le.s32.totalorder 1, %s24
      %p234 = scmp.lt.s32.totalorder %s24, 5
      %p235 = pnand %p233, %p234
      %p236 = pneg %p235
      // Predicated region
      $region9: #{tpu_custom_call.1} parent=5 // pred_check
        _
      $region10: #{tpu_custom_call.1} parent=5 // pred_check_branch
        %238 = sbr.rel (%p235) target = $region12
      $region11: #{tpu_custom_call.1} parent=5 // pred_region
        %s239 = ssub.s32 %s24, 1
        // Predicated region
        $region13: #{tpu_custom_call.1} parent=11 // pred_check
          %p240 = pneg %p113
        $region14: #{tpu_custom_call.1} parent=11 // pred_check_branch
          %242 = sbr.rel (%p240) target = $region16
        $region15: #{tpu_custom_call.1} parent=11 // pred_region
          _
        $region16: #{tpu_custom_call.1} parent=11 // pred_fallthru
          _
        // Predicated region
        $region17: #{tpu_custom_call.1} parent=11 // pred_check
          %p243 = pneg %p134
        $region18: #{tpu_custom_call.1} parent=11 // pred_check_branch
          %245 = sbr.rel (%p243) target = $region20
        $region19: #{tpu_custom_call.1} parent=11 // pred_region
          _
        $region20: #{tpu_custom_call.1} parent=11 // pred_fallthru
          _
        // Predicated region
        $region21: #{tpu_custom_call.1} parent=11 // pred_check
          %p246 = pneg %p155
        $region22: #{tpu_custom_call.1} parent=11 // pred_check_branch
          %248 = sbr.rel (%p246) target = $region24
        $region23: #{tpu_custom_call.1} parent=11 // pred_region
          _
        $region24: #{tpu_custom_call.1} parent=11 // pred_fallthru
          _
        // Predicated region
        $region25: #{tpu_custom_call.1} parent=11 // pred_check
          %p249 = pneg %p176
        $region26: #{tpu_custom_call.1} parent=11 // pred_check_branch
          %251 = sbr.rel (%p249) target = $region28
        $region27: #{tpu_custom_call.1} parent=11 // pred_region
          _
        $region28: #{tpu_custom_call.1} parent=11 // pred_fallthru
          _
        // Predicated region
        $region29: #{tpu_custom_call.1} parent=11 // pred_check
          %p252 = pneg %p197
        $region30: #{tpu_custom_call.1} parent=11 // pred_check_branch
          %254 = sbr.rel (%p252) target = $region32
        $region31: #{tpu_custom_call.1} parent=11 // pred_region
          _
        $region32: #{tpu_custom_call.1} parent=11 // pred_fallthru
          _
      $region12: #{tpu_custom_call.1} parent=5 // pred_fallthru
        _
      %p255 = scmp.lt.s32.totalorder %s24, 4
      // Predicated region
      $region33: #{tpu_custom_call.1} parent=5 // pred_check
        %p256 = pneg %p255
      $region34: #{tpu_custom_call.1} parent=5 // pred_check_branch
        %258 = sbr.rel (%p256) target = $region36
      $region35: #{tpu_custom_call.1} parent=5 // pred_region
        // Predicated region
        $region37: #{tpu_custom_call.1} parent=35 // pred_check
          %p259 = pneg %p58
        $region38: #{tpu_custom_call.1} parent=35 // pred_check_branch
          %261 = sbr.rel (%p259) target = $region40
        $region39: #{tpu_custom_call.1} parent=35 // pred_region
          %s262 = sand.u32 %s48, 1
          %s263 = scalar_lea.sflag [#allocation4], %s262
          %s264 = sand.u32 %s48, 1
          %s265 = smul.addr %s264, 4
          %s266 = scalar_lea.vmem [#allocation3], %s265
          %s268 = ssub.s32 64, 64
          %269 = vsyncadd %s263, %s268
          %s270 = smul.addr %s31, 2
          %s271 = sadd.s32 %s32, %s270
          %s272 = smul.addr %s271, 64
          %s273 = scalar_lea.hbm %s0, %s272
          %s275 = sshll.u32 %s266, 4
          %s276 = int_to_ptr.vmem [resolvable:$true] %s275
          %278 = dma.hbm_to_vmem [thread:$0]  %s273, 64, %s276, %s263
        $region40: #{tpu_custom_call.1} parent=35 // pred_fallthru
          _
        // Predicated region
        $region41: #{tpu_custom_call.1} parent=35 // pred_check
          %p279 = pneg %p86
        $region42: #{tpu_custom_call.1} parent=35 // pred_check_branch
          %281 = sbr.rel (%p279) target = $region44
        $region43: #{tpu_custom_call.1} parent=35 // pred_region
          %s282 = sand.u32 %s76, 1
          %s283 = scalar_lea.sflag [#allocation7], %s282
          %s284 = sand.u32 %s76, 1
          %s285 = smul.addr %s284, 4
          %s286 = scalar_lea.vmem [#allocation6], %s285
          %s288 = ssub.s32 64, 64
          %289 = vsyncadd %s283, %s288
          %s290 = smul.addr %s31, 2
          %s291 = sadd.s32 %s32, %s290
          %s292 = smul.addr %s291, 64
          %s293 = scalar_lea.hbm %s1, %s292
          %s295 = sshll.u32 %s286, 4
          %s296 = int_to_ptr.vmem [resolvable:$true] %s295
          %298 = dma.hbm_to_vmem [thread:$0]  %s293, 64, %s296, %s283
        $region44: #{tpu_custom_call.1} parent=35 // pred_fallthru
          _
      $region36: #{tpu_custom_call.1} parent=5 // pred_fallthru
        _
      %p299 = scmp.le.s32.totalorder 1, %s24
      %p300 = scmp.lt.s32.totalorder %s24, 5
      %p301 = pnand %p299, %p300
      %p302 = pneg %p301
      // Predicated region
      $region45: #{tpu_custom_call.1} parent=5 // pred_check
        _
      $region46: #{tpu_custom_call.1} parent=5 // pred_check_branch
        %304 = sbr.rel (%p301) target = $region48
      $region47: #{tpu_custom_call.1} parent=5 // pred_region
        %s305 = ssub.s32 %s24, 1
        %s306 = sand.u32 %s51, 1
        %s307 = scalar_lea.sflag [#allocation4], %s306
        %s308 = sand.u32 %s51, 1
        %s309 = smul.addr %s308, 4
        %s310 = scalar_lea.vmem [#allocation3], %s309
        // Predicated region
        $region49: #{tpu_custom_call.1} parent=47 // pred_check
          %p311 = pneg %p64
        $region50: #{tpu_custom_call.1} parent=47 // pred_check_branch
          %313 = sbr.rel (%p311) target = $region52
        $region51: #{tpu_custom_call.1} parent=47 // pred_region
          %314 = dma.done %s307, 64
        $region52: #{tpu_custom_call.1} parent=47 // pred_fallthru
          _
        %s315 = sand.u32 %s79, 1
        %s316 = scalar_lea.sflag [#allocation7], %s315
        %s317 = sand.u32 %s79, 1
        %s318 = smul.addr %s317, 4
        %s319 = scalar_lea.vmem [#allocation6], %s318
        // Predicated region
        $region53: #{tpu_custom_call.1} parent=47 // pred_check
          %p320 = pneg %p92
        $region54: #{tpu_custom_call.1} parent=47 // pred_check_branch
          %322 = sbr.rel (%p320) target = $region56
        $region55: #{tpu_custom_call.1} parent=47 // pred_region
          %323 = dma.done %s316, 64
        $region56: #{tpu_custom_call.1} parent=47 // pred_fallthru
          _
        %s324 = sand.u32 %s51, 1
        %s325 = scalar_lea.sflag [#allocation4], %s324
        %s326 = sand.u32 %s51, 1
        %s327 = smul.addr %s326, 4
        %s328 = scalar_lea.vmem [#allocation3], %s327
        %p329 = pneg %p64
        %p330 = pneg %p61
        %s331 = sand.u32 %s79, 1
        %s332 = scalar_lea.sflag [#allocation7], %s331
        %s333 = sand.u32 %s79, 1
        %s334 = smul.addr %s333, 4
        %s335 = scalar_lea.vmem [#allocation6], %s334
        %p336 = pneg %p92
        %p337 = pneg %p89
        %p338 = pneg %p113
        %p339 = pneg %p110
        %p340 = pneg %p134
        %p341 = pneg %p131
        %p342 = pneg %p155
        %p343 = pneg %p152
        %p344 = pneg %p176
        %p345 = pneg %p173
        %p346 = pneg %p197
        %p347 = pneg %p194
        %p348 = pneg %p225
        %p349 = pneg %p222
        %s350 = sand.u32 %s212, 1
        %s351 = scalar_lea.sflag [#allocation5], %s350
        %s352 = sand.u32 %s212, 1
        %s353 = smul.addr %s352, 4
        %s354 = scalar_lea.vmem [#allocation8], %s353
        %v355 = vld [vmem:[%s310] sm:$0xf]
        %v356 = vld [vmem:[%s319] sm:$0xf]
        %v357 = vld [vmem:[%s2] sm:$0xf]
        %v358 = vld [vmem:[%s3] sm:$0xf]
        %360 = vset.pattern.permute.xlu0 0
        %361 = vperm.xlu0 %360, %v357
        %v362 = vpop.permute.xlu0 %361
        %v364 = vlaneseq
        %v365 = vshrl.u32 %v364, 7
        %v366 = vsub.s32 0, %v365
        %v367 = vrot.slane %v355, %v366
        %v368 = vmul.f32 %v362, %v367
        %370 = vset.pattern.permute.xlu0 0
        %371 = vperm.xlu0 %370, %v358
        %v372 = vpop.permute.xlu0 %371
        %v374 = vlaneseq
        %v375 = vshrl.u32 %v374, 7
        %v376 = vsub.s32 0, %v375
        %v377 = vrot.slane %v356, %v376
        %v378 = vmul.f32 %v372, %v377
        %v379 = vadd.f32 %v368, %v378
        %380 = vset.pattern.permute.xlu0 1
        %381 = vperm.xlu0 %380, %v357
        %v382 = vpop.permute.xlu0 %381
        %v384 = vlaneseq
        %v385 = vshrl.u32 %v384, 7
        %v386 = vsub.s32 1, %v385
        %v387 = vrot.slane %v355, %v386
        %v388 = vmul.f32 %v382, %v387
        %v389 = vadd.f32 %v379, %v388
        %390 = vset.pattern.permute.xlu0 1
        %391 = vperm.xlu0 %390, %v358
        %v392 = vpop.permute.xlu0 %391
        %v394 = vlaneseq
        %v395 = vshrl.u32 %v394, 7
        %v396 = vsub.s32 1, %v395
        %v397 = vrot.slane %v356, %v396
        %v398 = vmul.f32 %v392, %v397
        %v399 = vadd.f32 %v389, %v398
        %400 = vset.pattern.permute.xlu0 2
        %401 = vperm.xlu0 %400, %v357
        %v402 = vpop.permute.xlu0 %401
        %v404 = vlaneseq
        %v405 = vshrl.u32 %v404, 7
        %v406 = vsub.s32 2, %v405
        %v407 = vrot.slane %v355, %v406
        %v408 = vmul.f32 %v402, %v407
        %v409 = vadd.f32 %v399, %v408
        %410 = vset.pattern.permute.xlu0 2
        %411 = vperm.xlu0 %410, %v358
        %v412 = vpop.permute.xlu0 %411
        %v414 = vlaneseq
        %v415 = vshrl.u32 %v414, 7
        %v416 = vsub.s32 2, %v415
        %v417 = vrot.slane %v356, %v416
        %v418 = vmul.f32 %v412, %v417
        %v419 = vadd.f32 %v409, %v418
        %420 = vset.pattern.permute.xlu0 3
        %421 = vperm.xlu0 %420, %v357
        %v422 = vpop.permute.xlu0 %421
        %v424 = vlaneseq
        %v425 = vshrl.u32 %v424, 7
        %v426 = vsub.s32 3, %v425
        %v427 = vrot.slane %v355, %v426
        %v428 = vmul.f32 %v422, %v427
        %v429 = vadd.f32 %v419, %v428
        %430 = vset.pattern.permute.xlu0 3
        %431 = vperm.xlu0 %430, %v358
        %v432 = vpop.permute.xlu0 %431
        %v434 = vlaneseq
        %v435 = vshrl.u32 %v434, 7
        %v436 = vsub.s32 3, %v435
        %v437 = vrot.slane %v356, %v436
        %v438 = vmul.f32 %v432, %v437
        %v439 = vadd.f32 %v429, %v438
        %v440 = vld [vmem:[%s4] sm:$0xf]
        %442 = vset.pattern.permute.xlu0 0
        %443 = vperm.xlu0 %442, %v440
        %v444 = vpop.permute.xlu0 %443
        %v446 = vadd.f32 %v439, %v444
        %v447 = vmax.f32 %v446, 0.0
        %v448 = vld [vmem:[%s5] sm:$0xf]
        %450 = vset.pattern.permute.xlu0 0
        %451 = vperm.xlu0 %450, %v448
        %v452 = vpop.permute.xlu0 %451
        %v454 = vmul.f32 %v447, %v452
        %vm455 = vcmask 1043456
        %v456 = vsel %vm455, %v454, 0.0
        %v457 = vrot.slane %v456, 4
        %v458 = vadd.f32 %v456, %v457
        %v459 = vrot.slane %v458, 2
        %v460 = vadd.f32 %v458, %v459
        %v461 = vrot.slane %v460, 1
        %v462 = vadd.f32 %v460, %v461
        %v463 = vld [vmem:[#allocation2] sm:$0x1]
        %465 = vset.pattern.permute.xlu0 0
        %466 = vperm.xlu0 %465, %v463
        %v467 = vpop.permute.xlu0 %466
        %v469 = vlaneseq
        %v470 = vshrl.u32 %v469, 7
        %v471 = vsub.s32 0, %v470
        %v472 = vrot.slane %v467, %v471
        %v473 = vadd.f32 %v462, %v472
        %v474 = vxor.u32 %v473, 2147483648
        %v475 = vmul.f32 %v474, 1.442695
        %v476 = vpow.pop %v475
        %v477 = vadd.f32 %v476, 1.0
        %v478 = vrcp.pop %v477
        %v479 = vmul.f32 1.0, %v478
        %v480 = vmul.f32 %v356, %v479
        %481 = vst [vmem:[%s354] sm:$0xf] %v480
        %s482 = sand.u32 %s212, 1
        %s483 = scalar_lea.sflag [#allocation5], %s482
        %s484 = sand.u32 %s212, 1
        %s485 = smul.addr %s484, 4
        %s486 = scalar_lea.vmem [#allocation8], %s485
        // Predicated region
        $region57: #{tpu_custom_call.1} parent=47 // pred_check
          %p487 = pneg %p222
        $region58: #{tpu_custom_call.1} parent=47 // pred_check_branch
          %489 = sbr.rel (%p487) target = $region60
        $region59: #{tpu_custom_call.1} parent=47 // pred_region
          %s491 = ssub.s32 64, 64
          %492 = vsyncadd %s483, %s491
          %s493 = smul.addr %s33, 2
          %s494 = sadd.s32 %s34, %s493
          %s495 = smul.addr %s494, 64
          %s496 = scalar_lea.hbm %s7, %s495
          %s498 = sshll.u32 %s486, 4
          %s499 = int_to_ptr.vmem [resolvable:$true] %s498
          %501 = dma.vmem_to_hbm [thread:$0]  %s499, 64, %s496, %s483
        $region60: #{tpu_custom_call.1} parent=47 // pred_fallthru
          _
      $region48: #{tpu_custom_call.1} parent=5 // pred_fallthru
        _
      %p502 = scmp.le.s32.totalorder 2, %s24
      // Predicated region
      $region61: #{tpu_custom_call.1} parent=5 // pred_check
        %p503 = pneg %p502
      $region62: #{tpu_custom_call.1} parent=5 // pred_check_branch
        %505 = sbr.rel (%p503) target = $region64
      $region63: #{tpu_custom_call.1} parent=5 // pred_region
        %s506 = ssub.s32 %s24, 2
        // Predicated region
        $region65: #{tpu_custom_call.1} parent=63 // pred_check
          %p507 = pneg %p228
        $region66: #{tpu_custom_call.1} parent=63 // pred_check_branch
          %509 = sbr.rel (%p507) target = $region68
        $region67: #{tpu_custom_call.1} parent=63 // pred_region
          %s510 = sand.u32 %s213, 1
          %s511 = scalar_lea.sflag [#allocation5], %s510
          %s512 = sand.u32 %s213, 1
          %s513 = smul.addr %s512, 4
          %s514 = scalar_lea.vmem [#allocation8], %s513
          %515 = dma.done %s511, 64
        $region68: #{tpu_custom_call.1} parent=63 // pred_fallthru
          _
      $region64: #{tpu_custom_call.1} parent=5 // pred_fallthru
        _
    $region6: #{tpu_custom_call.1} parent=1 // loop_footer
      %s28 = sadd.s32 1, %s24
    $region7: #{tpu_custom_call.1} parent=1 // loop_footer_branch
      %23 = sbr.rel target = $region3
    $region8: #{tpu_custom_call.1} parent=1 // loop_exit
      _
    %516 = vsyncpa [#allocation4], 1
    %s517 = scalar_lea.sflag [#allocation4], 1
    %518 = vsyncpa %s517, 1
    %519 = vsyncpa [#allocation7], 1
    %s520 = scalar_lea.sflag [#allocation7], 1
    %521 = vsyncpa %s520, 1
    %522 = vsyncpa [#allocation5], 1
    %s523 = scalar_lea.sflag [#allocation5], 1
    %524 = vsyncpa %s523, 1

</llo_original>
